<compile_context>
chip_gen: v7x
topology: tpu7x:2x2x1
jax: 0.10.0
libtpu: 0.0.40
codegen_flags: <defaults>
</compile_context>

<pallas_src>
import jax
import jax.numpy as jnp
from jax import lax
from jax.experimental import pallas as pl
from jax.experimental.pallas import tpu as pltpu

_F32_TINY = float(jnp.finfo(jnp.float32).tiny)


def _round_up(x, m):
    return (x + m - 1) // m * m


def _pick_fold(batch, k):
    """Smallest fold f dividing `batch` that maximizes f32 sublane occupancy of f*k."""
    best_f, best_occ = 1, k / _round_up(k, 8)
    for f in range(2, batch + 1):
        if batch % f:
            continue
        kf = f * k
        occ = kf / _round_up(kf, 8)
        if occ > best_occ + 1e-9:
            best_f, best_occ = f, occ
        if best_occ >= 1.0:
            break
    return best_f


def _make_kernel(*, hw, t, t_acc, n_inner, needs_mask):
    n_chunks = t // t_acc

    def kernel(g_ref, outx_ref, outg_ref, accx_ref, accg_ref):
        ti = pl.program_id(2)

        @pl.when(ti == 0)
        def _():
            accx_ref[...] = jnp.zeros_like(accx_ref)
            accg_ref[...] = jnp.zeros_like(accg_ref)

        if needs_mask:
            # Absolute lane offset of this tile, derived from the grid position (the
            # index_map may clamp the *block* index; the mask never does).
            start = (pl.program_id(1) * n_inner + ti) * t
            lane_iota = lax.broadcasted_iota(jnp.int32, (g_ref.shape[1], t_acc), 1)

        px = None
        pg = None
        for c in range(n_chunks):  # static unroll, lane-aligned 128-multiple slices
            gc = g_ref[0, :, c * t_acc:(c + 1) * t_acc]            # (Kf, T_ACC) load
            if needs_mask:
                col = lane_iota + (start + c * t_acc)
                gc = jnp.where(col < hw, gc, 0.0)                  # padded lanes -> 0
            xc = gc * jnp.log(jnp.maximum(gc, _F32_TINY))          # 0 * log(tiny) == 0
            px = xc if px is None else px + xc
            pg = gc if pg is None else pg + gc
        accx_ref[...] += px          # single narrow read-modify-write per grid step
        accg_ref[...] += pg

        @pl.when(ti == pl.num_programs(2) - 1)
        def _():
            # The only cross-lane reductions, once per (group, half).
            outx_ref[...] = jnp.sum(accx_ref[...]).reshape(1, 1, 1, 1)
            outg_ref[...] = jnp.sum(accg_ref[...], axis=1).reshape(1, 1, 1, -1)

    return kernel


def gate_shaping_loss(gate, *, max_block_bytes=6 << 20):
    """gate: (B, K, H, W) float32 (softmax over K) -> scalar float32 loss."""
    gate = gate.astype(jnp.float32)
    B, K, H, W = gate.shape
    HW = H * W
    denom = float(B * HW)

    # --- batch fold into the channel/sublane axis (free contiguous reshape) --------
    fold = _pick_fold(B, K)
    Bg = B // fold
    Kf = fold * K
    g = gate.reshape(Bg, Kf, HW)

    # --- spatial tile size ----------------------------------------------------------
    max_block_bytes = int(min(max_block_bytes, 16 << 20))
    row_bytes = _round_up(Kf, 8) * 4              # VMEM sublane-padded row
    if HW < 128:
        T = HW                                    # block dim == full array dim
    else:
        t_cap = max(128, (max_block_bytes // row_bytes) // 128 * 128)
        T = min(t_cap, (HW // 128) * 128)
        if T >= 512:
            T = (T // 512) * 512
    T_ACC = min(512, T)                           # narrow accumulator width (T % T_ACC == 0)
    n_tiles = -(-HW // T)

    # --- grid: (groups, halves, tiles); keep >=2-way parallelism for v7x ------------
    P = 2 if (Bg == 1 and n_tiles >= 2) else 1
    n_inner = -(-n_tiles // P)
    needs_mask = (P * n_inner * T != HW)

    if P * n_inner > n_tiles:                     # odd tile count split into two halves
        last = n_tiles - 1
        in_map = lambda b, p, t: (b, 0, jnp.minimum(p * n_inner + t, last))
    else:
        in_map = lambda b, p, t: (b, 0, p * n_inner + t)

    kernel = _make_kernel(hw=HW, t=T, t_acc=T_ACC, n_inner=n_inner,
                          needs_mask=needs_mask)

    # --- explicit VMEM budget (safe on v7x 64 MiB; generous on v5e/v6e 128 MiB) ------
    block_bytes = _round_up(Kf, 8) * T * 4
    acc_bytes = 2 * _round_up(Kf, 8) * T_ACC * 4
    vmem_limit = int(min(48 << 20,
                         max(16 << 20, 2 * block_bytes + acc_bytes + (4 << 20))))

    out_x, out_g = pl.pallas_call(
        kernel,
        out_shape=(
            jax.ShapeDtypeStruct((Bg, P, 1, 1), jnp.float32),    # per-(group,half) sum x*log x
            jax.ShapeDtypeStruct((Bg, P, 1, Kf), jnp.float32),   # per-(group,half) channel sums
        ),
        grid_spec=pltpu.PrefetchScalarGridSpec(
            num_scalar_prefetch=0,
            grid=(Bg, P, n_inner),
            in_specs=[pl.BlockSpec((1, Kf, T), in_map)],
            out_specs=[
                pl.BlockSpec((1, 1, 1, 1), lambda b, p, t: (b, p, 0, 0)),
                pl.BlockSpec((1, 1, 1, Kf), lambda b, p, t: (b, p, 0, 0)),
            ],
            scratch_shapes=[
                pltpu.VMEM((Kf, T_ACC), jnp.float32),   # running x*log(x) lane partials
                pltpu.VMEM((Kf, T_ACC), jnp.float32),   # running gate-sum lane partials
            ],
        ),
        compiler_params=pltpu.CompilerParams(
            dimension_semantics=("parallel", "parallel", "arbitrary"),
            vmem_limit_bytes=vmem_limit,
        ),
    )(g)

    # --- tiny final combine in plain XLA (unfolds the batch folding) -----------------
    term1 = -jnp.sum(out_x) / denom
    ksum = jnp.sum(out_g, axis=(0, 1, 2)).reshape(fold, K).sum(axis=0)   # (K,)
    gmean = ksum / denom
    term2 = jnp.sum(gmean * jnp.log(gmean))
    return term1 + 0.5 * term2


def _reference(gate):
    # Pure-JAX reference mirroring the PyTorch module.
    term1 = -jnp.mean(jnp.sum(gate * jnp.log(gate), axis=1))
    gmean = jnp.mean(gate, axis=(0, 2, 3))
    term2 = jnp.sum(gmean * jnp.log(gmean))
    return term1 + 0.5 * term2


if __name__ == "__main__":
    key = jax.random.PRNGKey(0)
    # Gates are softmax outputs of the original model: strictly positive, sum to 1 over K.
    cases = [
        ((2, 4, 16, 16), {}),                           # aligned HW, fold -> Kf=8
        ((2, 4, 14, 14), {}),                           # ragged HW, spatial half-split
        ((1, 4, 26, 26), dict(max_block_bytes=8192)),   # odd tile count, clamped index_map
    ]
    for i, (shape, kwargs) in enumerate(cases):
        key, sub = jax.random.split(key)
        logits = jax.random.normal(sub, shape, dtype=jnp.float32)
        gate = jax.nn.softmax(logits, axis=1)
        loss = gate_shaping_loss(gate, **kwargs)
        jax.block_until_ready(loss)
        ref = _reference(gate)
        assert jnp.allclose(loss, ref, atol=1e-5, rtol=1e-5), (i, loss, ref)
    print("KERNEL_OK")
</pallas_src>

<mosaic_0001>
module attributes {stable_mosaic.version = 11 : i64} {
  func.func @kernel(%arg0: i32, %arg1: i32, %arg2: i32, %arg3: memref<1x8x256xf32, #tpu.memory_space<vmem>>, %arg4: memref<1x1x1x1xf32, #tpu.memory_space<vmem>>, %arg5: memref<1x1x1x8xf32, #tpu.memory_space<vmem>>, %arg6: memref<8x256xf32, #tpu.memory_space<vmem>>, %arg7: memref<8x256xf32, #tpu.memory_space<vmem>>) attributes {dimension_semantics = [#tpu.dimension_semantics<parallel>, #tpu.dimension_semantics<parallel>, #tpu.dimension_semantics<arbitrary>], iteration_bounds = array<i64: 1, 1, 1>, scalar_prefetch = 0 : i64, scratch_operands = 2 : i64, tpu.core_type = #tpu.core_type<tc>, window_params = [{transform_indices = @transform_0, window_bounds = array<i64: 1, 8, 256>}, {transform_indices = @transform_1, window_bounds = array<i64: 1, 1, 1, 1>}, {transform_indices = @transform_2, window_bounds = array<i64: 1, 1, 1, 8>}]} {
    %c0_i32 = arith.constant 0 : i32
    %0 = arith.cmpi eq, %arg2, %c0_i32 : i32
    %1 = arith.extui %0 : i1 to i32
    %c0_i32_0 = arith.constant 0 : i32
    %2 = arith.cmpi ne, %1, %c0_i32_0 : i32
    scf.if %2 {
      %cst_13 = arith.constant 0.000000e+00 : f32
      %18 = vector.broadcast %cst_13 : f32 to vector<8x256xf32>
      %c0_14 = arith.constant 0 : index
      %c0_15 = arith.constant 0 : index
      %19 = vector.load %arg6[%c0_14, %c0_15] : memref<8x256xf32, #tpu.memory_space<vmem>>, vector<8x256xf32>
      tpu.vector_store %arg6[%c0_14, %c0_15], %18 {strides = array<i32>} : memref<8x256xf32, #tpu.memory_space<vmem>>, vector<8x256xf32>,
      %cst_16 = arith.constant 0.000000e+00 : f32
      %20 = vector.broadcast %cst_16 : f32 to vector<8x256xf32>
      %c0_17 = arith.constant 0 : index
      %c0_18 = arith.constant 0 : index
      %21 = vector.load %arg7[%c0_17, %c0_18] : memref<8x256xf32, #tpu.memory_space<vmem>>, vector<8x256xf32>
      tpu.vector_store %arg7[%c0_17, %c0_18], %20 {strides = array<i32>} : memref<8x256xf32, #tpu.memory_space<vmem>>, vector<8x256xf32>,
    } else {
    }
    %c0 = arith.constant 0 : index
    %c0_1 = arith.constant 0 : index
    %c0_2 = arith.constant 0 : index
    %3 = vector.load %arg3[%c0, %c0_1, %c0_2] : memref<1x8x256xf32, #tpu.memory_space<vmem>>, vector<1x8x256xf32>
    %4 = vector.shape_cast %3 : vector<1x8x256xf32> to vector<8x256xf32>
    %cst = arith.constant 1.17549435E-38 : f32
    %5 = vector.broadcast %cst : f32 to vector<8x256xf32>
    %6 = arith.maximumf %4, %5 : vector<8x256xf32>
    %7 = math.log %6 : vector<8x256xf32>
    %8 = arith.mulf %4, %7 : vector<8x256xf32>
    %c0_3 = arith.constant 0 : index
    %c0_4 = arith.constant 0 : index
    %9 = vector.load %arg6[%c0_3, %c0_4] : memref<8x256xf32, #tpu.memory_space<vmem>>, vector<8x256xf32>
    %10 = arith.addf %9, %8 : vector<8x256xf32>
    %c0_5 = arith.constant 0 : index
    %c0_6 = arith.constant 0 : index
    %11 = vector.load %arg6[%c0_5, %c0_6] : memref<8x256xf32, #tpu.memory_space<vmem>>, vector<8x256xf32>
    tpu.vector_store %arg6[%c0_5, %c0_6], %10 {strides = array<i32>} : memref<8x256xf32, #tpu.memory_space<vmem>>, vector<8x256xf32>,
    %c0_7 = arith.constant 0 : index
    %c0_8 = arith.constant 0 : index
    %12 = vector.load %arg7[%c0_7, %c0_8] : memref<8x256xf32, #tpu.memory_space<vmem>>, vector<8x256xf32>
    %13 = arith.addf %12, %4 : vector<8x256xf32>
    %c0_9 = arith.constant 0 : index
    %c0_10 = arith.constant 0 : index
    %14 = vector.load %arg7[%c0_9, %c0_10] : memref<8x256xf32, #tpu.memory_space<vmem>>, vector<8x256xf32>
    tpu.vector_store %arg7[%c0_9, %c0_10], %13 {strides = array<i32>} : memref<8x256xf32, #tpu.memory_space<vmem>>, vector<8x256xf32>,
    %c0_i32_11 = arith.constant 0 : i32
    %15 = arith.cmpi eq, %arg2, %c0_i32_11 : i32
    %16 = arith.extui %15 : i1 to i32
    %c0_i32_12 = arith.constant 0 : i32
    %17 = arith.cmpi ne, %16, %c0_i32_12 : i32
    scf.if %17 {
      %c0_13 = arith.constant 0 : index
      %c0_14 = arith.constant 0 : index
      %18 = vector.load %arg6[%c0_13, %c0_14] : memref<8x256xf32, #tpu.memory_space<vmem>>, vector<8x256xf32>
      %19 = vector.shape_cast %18 : vector<8x256xf32> to vector<1x8x256xf32>
      %cst_15 = arith.constant dense<0.000000e+00> : vector<1xf32>
      %20 = vector.multi_reduction <add>, %19, %cst_15 [1, 2] : vector<1x8x256xf32> to vector<1xf32>
      %21 = vector.shape_cast %20 : vector<1xf32> to vector<1x1x1xf32>
      %22 = vector.extract %21[0, 0, 0] : f32 from vector<1x1x1xf32>
      %23 = vector.broadcast %22 : f32 to vector<1x1x1x1xf32>
      %c0_16 = arith.constant 0 : index
      %c0_17 = arith.constant 0 : index
      %c0_18 = arith.constant 0 : index
      %c0_19 = arith.constant 0 : index
      %24 = vector.load %arg4[%c0_16, %c0_17, %c0_18, %c0_19] : memref<1x1x1x1xf32, #tpu.memory_space<vmem>>, vector<1x1x1x1xf32>
      tpu.vector_store %arg4[%c0_16, %c0_17, %c0_18, %c0_19], %23 {strides = array<i32>} : memref<1x1x1x1xf32, #tpu.memory_space<vmem>>, vector<1x1x1x1xf32>,
      %c0_20 = arith.constant 0 : index
      %c0_21 = arith.constant 0 : index
      %25 = vector.load %arg7[%c0_20, %c0_21] : memref<8x256xf32, #tpu.memory_space<vmem>>, vector<8x256xf32>
      %cst_22 = arith.constant dense<0.000000e+00> : vector<8xf32>
      %26 = vector.multi_reduction <add>, %25, %cst_22 [1] : vector<8x256xf32> to vector<8xf32>
      %27 = vector.shape_cast %26 : vector<8xf32> to vector<1x1x1x8xf32>
      %c0_23 = arith.constant 0 : index
      %c0_24 = arith.constant 0 : index
      %c0_25 = arith.constant 0 : index
      %c0_26 = arith.constant 0 : index
      %28 = vector.load %arg5[%c0_23, %c0_24, %c0_25, %c0_26] : memref<1x1x1x8xf32, #tpu.memory_space<vmem>>, vector<1x1x1x8xf32>
      tpu.vector_store %arg5[%c0_23, %c0_24, %c0_25, %c0_26], %27 {strides = array<i32>} : memref<1x1x1x8xf32, #tpu.memory_space<vmem>>, vector<1x1x1x8xf32>,
    } else {
    }
    return
  }
  func.func @transform_0(%arg0: i32, %arg1: i32, %arg2: i32) -> (i32, i32, i32) {
    %c1_i32 = arith.constant 1 : i32
    %0 = arith.muli %arg1, %c1_i32 : i32
    %1 = arith.addi %0, %arg2 : i32
    %c0_i32 = arith.constant 0 : i32
    %c0_i32_0 = arith.constant 0 : i32
    return %arg0, %c0_i32, %1 : i32, i32, i32
  }
  func.func @transform_1(%arg0: i32, %arg1: i32, %arg2: i32) -> (i32, i32, i32, i32) {
    %c0_i32 = arith.constant 0 : i32
    %c0_i32_0 = arith.constant 0 : i32
    %c0_i32_1 = arith.constant 0 : i32
    return %arg0, %arg1, %c0_i32, %c0_i32_0 : i32, i32, i32, i32
  }
  func.func @transform_2(%arg0: i32, %arg1: i32, %arg2: i32) -> (i32, i32, i32, i32) {
    %c0_i32 = arith.constant 0 : i32
    %c0_i32_0 = arith.constant 0 : i32
    %c0_i32_1 = arith.constant 0 : i32
    return %arg0, %arg1, %c0_i32, %c0_i32_0 : i32, i32, i32, i32
  }
}

</mosaic_0001>

<llo_original>
// kernel: tpu_custom_call.1
$region0: #{tpu_custom_call.1}
  #allocation0 [shape = 'u32[]', space=smem, size = 0x4, offset = 0x4, fixed_abs, tag = 'smem constant byte address 0x4 - core index']
  #allocation1 [shape = 'u32[144,128]{1,0:T(1,128)}', space=vmem, size = 0x12000, scoped, tag = 'internal scratch']
  #allocation2 [shape = 'f32[8,256]{1,0:T(8,128)}', space=vmem, size = 0x2000, scoped, tag = 'scratch operand']
  #allocation3 [shape = 'f32[8,256]{1,0:T(8,128)}', space=vmem, size = 0x2000, scoped, tag = 'scratch operand']
  %s0 = inlined_call_operand.hbm [shape: f32[1,8,256], index: 0, kind: input, shape index: {}]
  %s1 = inlined_call_operand.hbm [shape: f32[1,1,1,1], index: 1, kind: output, shape index: {0}]
  %s2 = inlined_call_operand.hbm [shape: f32[1,1,1,8], index: 2, kind: output, shape index: {1}]
  %3 = xla_tuple %s1, %s2
  %s4 = sld [smem:[#allocation0]]
  $region34: #{tpu_custom_call.1} parent=0
    _
  %s6 = ssub.s32 1, %s4
  %s7 = scalar_select 0, %s6, %s4
  $region1: #{tpu_custom_call.1} parent=0
    #allocation4 [shape = 'u8[8192]{0}', space=vmem, size = 0x2000, scoped, tag = 'input window, operand 0, single buffered']
    #allocation5 [shape = 's32[1]{0}', space=sflag, size = 0x4, scoped, tag = 'scoped memory for tpu_custom_call.1']
    #allocation6 [shape = 's32[1]{0}', space=sflag, size = 0x4, scoped, tag = 'scoped memory for tpu_custom_call.1']
    #allocation7 [shape = 'u8[512]{0}', space=vmem, size = 0x400, scoped, tag = 'output window, operand 0, single buffered']
    #allocation8 [shape = 'u8[512]{0}', space=vmem, size = 0x400, scoped, tag = 'output window, operand 1, single buffered']
    #allocation9 [shape = 's32[1]{0}', space=sflag, size = 0x4, scoped, tag = 'scoped memory for tpu_custom_call.1']
    %8 = vsyncpa [#allocation5], 0
    %9 = vsyncpa [#allocation6], 0
    %10 = vsyncpa [#allocation9], 0
    // Predicated region
    $region2: #{tpu_custom_call.1} parent=1 // pred_check
      _
    $region3: #{tpu_custom_call.1} parent=1 // pred_check_branch
      %12 = sbr.rel (0) target = $region5
    $region4: #{tpu_custom_call.1} parent=1 // pred_region
      %s13 = sadd.s32 0, 0
      %s14 = smul.u32 2, %s13
      %s16 = ssub.s32 256, 256
      %17 = vsyncadd [#allocation5], %s16
      %s18 = smul.addr %s14, 128
      %s19 = scalar_lea.hbm %s0, %s18
      %s21 = sshll.u32 [#allocation4], 4
      %s22 = int_to_ptr.vmem [resolvable:$true] %s21
      %24 = dma.hbm_to_vmem [thread:$0]  %s19, 256, %s22, [#allocation5]
    $region5: #{tpu_custom_call.1} parent=1 // pred_fallthru
      _
    // Predicated region
    $region6: #{tpu_custom_call.1} parent=1 // pred_check
      _
    $region7: #{tpu_custom_call.1} parent=1 // pred_check_branch
      %26 = sbr.rel (0) target = $region9
    $region8: #{tpu_custom_call.1} parent=1 // pred_region
      %27 = dma.done [#allocation5], 256
    $region9: #{tpu_custom_call.1} parent=1 // pred_fallthru
      _
    %s28 = sadd.s32 0, 0
    %s29 = smul.u32 2, %s28
    %p30 = scmp.eq.s32.totalorder 0, 0
    // Predicated region
    $region10: #{tpu_custom_call.1} parent=1 // pred_check
      %p31 = pneg %p30
    $region11: #{tpu_custom_call.1} parent=1 // pred_check_branch
      %33 = sbr.rel (%p31) target = $region13
    $region12: #{tpu_custom_call.1} parent=1 // pred_region
      %34 = vst [vmem:[#allocation2] sm:$0xff] 0.0
      %35 = vst [vmem:[#allocation2 + $0x8] sm:$0xff] 0.0
      %36 = vst [vmem:[#allocation3] sm:$0xff] 0.0
      %37 = vst [vmem:[#allocation3 + $0x8] sm:$0xff] 0.0
    $region13: #{tpu_custom_call.1} parent=1 // pred_fallthru
      _
    %v38 = vld [vmem:[#allocation4] sm:$0xff]
    %v39 = vld [vmem:[#allocation4 + $0x8] sm:$0xff]
    %v40 = vmax.f32 %v38, 1.1754944e-38
    %v41 = vmax.f32 %v39, 1.1754944e-38
    %v42 = vlog2.pop %v40
    %v43 = vmul.f32 %v42, 0.6931472
    %v44 = vlog2.pop %v41
    %v45 = vmul.f32 %v44, 0.6931472
    %v46 = vmul.f32 %v38, %v43
    %v47 = vmul.f32 %v39, %v45
    %v48 = vld [vmem:[#allocation2] sm:$0xff]
    %v49 = vld [vmem:[#allocation2 + $0x8] sm:$0xff]
    %v50 = vadd.f32 %v48, %v46
    %v51 = vadd.f32 %v49, %v47
    %52 = vst [vmem:[#allocation2] sm:$0xff] %v50
    %53 = vst [vmem:[#allocation2 + $0x8] sm:$0xff] %v51
    %v54 = vld [vmem:[#allocation3] sm:$0xff]
    %v55 = vld [vmem:[#allocation3 + $0x8] sm:$0xff]
    %v56 = vadd.f32 %v54, %v38
    %v57 = vadd.f32 %v55, %v39
    %58 = vst [vmem:[#allocation3] sm:$0xff] %v56
    %59 = vst [vmem:[#allocation3 + $0x8] sm:$0xff] %v57
    // Predicated region
    $region14: #{tpu_custom_call.1} parent=1 // pred_check
      %p60 = pneg %p30
    $region15: #{tpu_custom_call.1} parent=1 // pred_check_branch
      %62 = sbr.rel (%p60) target = $region17
    $region16: #{tpu_custom_call.1} parent=1 // pred_region
      %v63 = vld [vmem:[#allocation2] sm:$0xff]
      %v64 = vld [vmem:[#allocation2 + $0x8] sm:$0xff]
      %v65 = vadd.f32 %v63, %v64
      %66 = vadd.xlane.f32.xlu0 %v65
      %v67 = vpop.xlane.xlu0 %66
      %v68 = vrot.slane %v67, 4
      %v69 = vadd.f32 %v67, %v68
      %v70 = vrot.slane %v69, 2
      %v71 = vadd.f32 %v69, %v70
      %v72 = vrot.slane %v71, 1
      %v73 = vadd.f32 %v71, %v72
      %s74 = vtos %v73
      %v75 = vstv %s74
      %vm76 = vcmask 0
      %77 = vst.msk [vmem:[#allocation7] sm:$0x1] %vm76, %v75
      %v78 = vld [vmem:[#allocation3] sm:$0xff]
      %v79 = vld [vmem:[#allocation3 + $0x8] sm:$0xff]
      %v80 = vadd.f32 %v78, %v79
      %81 = vadd.xlane.f32.xlu0 %v80
      %v82 = vpop.xlane.xlu0 %81
      %v84 = vlaneseq
      %v85 = vand.u32 %v84, 127
      %v86 = vlaneseq
      %v87 = vshrl.u32 %v86, 7
      %v88 = vsub.s32 %v85, %v87
      %v89 = vrot.slane %v82, %v88
      %vm91 = vcmask 57344
      %92 = vst.msk [vmem:[#allocation8] sm:$0x1] %vm91, %v89
    $region17: #{tpu_custom_call.1} parent=1 // pred_fallthru
      _
    // Predicated region
    $region18: #{tpu_custom_call.1} parent=1 // pred_check
      _
    $region19: #{tpu_custom_call.1} parent=1 // pred_check_branch
      %94 = sbr.rel (0) target = $region21
    $region20: #{tpu_custom_call.1} parent=1 // pred_region
      %s96 = ssub.s32 16, 16
      %97 = vsyncadd [#allocation6], %s96
      %s99 = sshll.u32 [#allocation7], 4
      %s100 = int_to_ptr.vmem [resolvable:$true] %s99
      %102 = dma.vmem_to_hbm [thread:$0]  %s100, 16, %s1, [#allocation6]
    $region21: #{tpu_custom_call.1} parent=1 // pred_fallthru
      _
    // Predicated region
    $region22: #{tpu_custom_call.1} parent=1 // pred_check
      _
    $region23: #{tpu_custom_call.1} parent=1 // pred_check_branch
      %104 = sbr.rel (0) target = $region25
    $region24: #{tpu_custom_call.1} parent=1 // pred_region
      %s106 = ssub.s32 16, 16
      %107 = vsyncadd [#allocation9], %s106
      %s109 = sshll.u32 [#allocation8], 4
      %s110 = int_to_ptr.vmem [resolvable:$true] %s109
      %112 = dma.vmem_to_hbm [thread:$0]  %s110, 16, %s2, [#allocation9]
    $region25: #{tpu_custom_call.1} parent=1 // pred_fallthru
      _
    // Predicated region
    $region26: #{tpu_custom_call.1} parent=1 // pred_check
      _
    $region27: #{tpu_custom_call.1} parent=1 // pred_check_branch
      %114 = sbr.rel (0) target = $region29
    $region28: #{tpu_custom_call.1} parent=1 // pred_region
      %115 = dma.done [#allocation6], 16
    $region29: #{tpu_custom_call.1} parent=1 // pred_fallthru
      _
    // Predicated region
    $region30: #{tpu_custom_call.1} parent=1 // pred_check
      _
    $region31: #{tpu_custom_call.1} parent=1 // pred_check_branch
      %117 = sbr.rel (0) target = $region33
    $region32: #{tpu_custom_call.1} parent=1 // pred_region
      %118 = dma.done [#allocation9], 16
    $region33: #{tpu_custom_call.1} parent=1 // pred_fallthru
      _
    %119 = vsyncpa [#allocation5], 1
    %120 = vsyncpa [#allocation6], 1
    %121 = vsyncpa [#allocation9], 1

</llo_original>
